<compile_context>
chip_gen: v7x
topology: tpu7x:2x2x1
jax: 0.10.0
libtpu: 0.0.40
codegen_flags: <defaults>
</compile_context>

<pallas_src>
import jax
import jax.numpy as jnp
from jax.experimental import pallas as pl
from jax.experimental.pallas import tpu as pltpu

NUM_RECEPTIVE = 9  # conv3_1by1 out_channels == number of receptive-field maps


def receptive_attention_kernel(xin_ref, rec_ref,
                               w1_ref, w2_ref, w3_ref,
                               b12_ref, b3_ref, alpha_ref,
                               out_ref, att_ref):
    """Grid = (batch, L-block). Attention weights computed once per image."""

    # ---- attention MLP (only on the first L-block of this image) -------------
    @pl.when(pl.program_id(1) == 0)
    def _compute_attention():
        x = xin_ref[0].astype(jnp.float32)                    # (C, HW) channel-major
        b12 = b12_ref[...].astype(jnp.float32)                # (Cmid, 2)

        # 1x1 convs as channel-major matmuls (pixel axis = lanes, lane-dense).
        z = jnp.dot(w1_ref[...], x, preferred_element_type=jnp.float32) + b12[:, 0:1]
        z = jnp.maximum(z, 0.0)                               # ReLU (activation1)
        z = jnp.dot(w2_ref[...], z, preferred_element_type=jnp.float32) + b12[:, 1:2]
        z = jnp.maximum(z, 0.0)                               # ReLU (activation2)

        # adaptive_avg_pool2d((1,1)) commuted in front of the linear conv3_1by1.
        p = jnp.mean(z, axis=1, keepdims=True)                # (Cmid, 1)
        p = jnp.broadcast_to(p, (p.shape[0], 128))            # keep lanes dense
        logits = jnp.dot(w3_ref[...], p,
                         preferred_element_type=jnp.float32) + b3_ref[...]  # (9, 128)

        # softmax over the 9 receptive weights (all 128 lanes carry identical values)
        m = jnp.max(logits, axis=0, keepdims=True)
        e = jnp.exp(logits - m)
        att_ref[...] = e / jnp.sum(e, axis=0, keepdims=True)  # (9, 128)

    # ---- weighted sum of the 9 receptive slabs + PReLU, fully lane-dense -----
    att = att_ref[...]                                        # (9, 128), fp32
    fused = rec_ref[0, 0].astype(jnp.float32) * att[0:1, :]   # (Lt, 128)
    for k in range(1, NUM_RECEPTIVE):
        fused = fused + rec_ref[0, k].astype(jnp.float32) * att[k:k + 1, :]

    alpha = alpha_ref[...].astype(jnp.float32)                # (1, 128), channel-tiled
    out = jnp.where(fused >= 0.0, fused, alpha * fused)       # PReLU (activation3)
    out_ref[0] = out.astype(out_ref.dtype)


def _choose_l_tile(L, K, dtype_bytes=4, target_bytes=2 << 20):
    """Largest multiple-of-8 divisor of L keeping the receptive block <= target."""
    if L % 8 != 0:
        return L  # must take the full extent to satisfy the (8,128) rule
    divisors = [d for d in range(8, L + 1, 8) if L % d == 0]
    fitting = [d for d in divisors if d * 128 * K * dtype_bytes <= target_bytes]
    return max(fitting) if fitting else min(divisors)


def receptive_attention_forward(inp, receptive, params):
    """inp: (N, H, W, C); receptive: (9, N, H, W, C). Returns (N, H, W, C)."""
    N, H, W, C = inp.shape
    K = receptive.shape[0]
    assert K == NUM_RECEPTIVE
    Cmid = params["w1"].shape[-1]
    HW = H * W
    HWC = H * W * C
    assert HWC % 128 == 0, "H*W*C must be a multiple of 128 for the lane-dense layout"
    assert 128 % C == 0, "128 must be divisible by the channel count"
    L = HWC // 128
    Lt = _choose_l_tile(L, K)
    num_l_blocks = L // Lt

    # Layout plumbing (done once in the wrapper; pure reshapes/transposes).
    xin = jnp.transpose(inp, (0, 3, 1, 2)).reshape(N, C, HW)                # channel-major
    rec = jnp.transpose(receptive, (1, 0, 2, 3, 4)).reshape(N, K, L, 128)   # lane-dense

    w1t = params["w1"].T                                        # (Cmid, C)
    w2t = params["w2"].T                                        # (Cmid, Cmid)
    w3t = params["w3"].T                                        # (9, Cmid)
    b12 = jnp.stack([params["b1"], params["b2"]], axis=1)       # (Cmid, 2)
    b3 = params["b3"].reshape(K, 1)                             # (9, 1)
    alpha = jnp.tile(params["alpha"], 128 // C).reshape(1, 128)  # lane-tiled PReLU slope

    flops = N * (2 * HW * C * Cmid + 2 * HW * Cmid * Cmid + 2 * Cmid * K
                 + 2 * K * HWC + 4 * HWC)
    bytes_accessed = 4 * (inp.size + receptive.size + N * HWC
                          + w1t.size + w2t.size + w3t.size
                          + b12.size + b3.size + alpha.size)

    def const(shape):
        return pl.BlockSpec(shape, lambda n, l: (0,) * len(shape))

    grid_spec = pltpu.PrefetchScalarGridSpec(
        num_scalar_prefetch=0,
        grid=(N, num_l_blocks),
        in_specs=[
            # input stays resident across the L axis (same block for every l)
            pl.BlockSpec((1, C, HW), lambda n, l: (n, 0, 0)),
            # receptive slabs stream in L-blocks (bounded VMEM, pipelined DMA)
            pl.BlockSpec((1, K, Lt, 128), lambda n, l: (n, 0, l, 0)),
            const((Cmid, C)),                                    # conv1 weight (T)
            const((Cmid, Cmid)),                                 # conv2 weight (T)
            const((K, Cmid)),                                    # conv3 weight (T)
            const((Cmid, 2)),                                    # [b1 | b2]
            const((K, 1)),                                       # b3
            const((1, 128)),                                     # PReLU alpha (lane-tiled)
        ],
        out_specs=pl.BlockSpec((1, Lt, 128), lambda n, l: (n, l, 0)),
        scratch_shapes=[pltpu.VMEM((K, 128), jnp.float32)],      # softmax weights
    )

    out_flat = pl.pallas_call(
        receptive_attention_kernel,
        grid_spec=grid_spec,
        out_shape=jax.ShapeDtypeStruct((N, L, 128), inp.dtype),
        compiler_params=pltpu.CompilerParams(
            dimension_semantics=("parallel", "arbitrary")),
        cost_estimate=pl.CostEstimate(flops=flops,
                                      transcendentals=N * K * 128,
                                      bytes_accessed=bytes_accessed),
    )(xin, rec, w1t, w2t, w3t, b12, b3, alpha)

    return out_flat.reshape(N, H, W, C)


def reference_forward(inp, receptive, params):
    """Pure-JAX reference mirroring the PyTorch forward (softmax branch)."""
    z = jax.nn.relu(jnp.einsum("nhwc,cd->nhwd", inp, params["w1"]) + params["b1"])
    z = jax.nn.relu(jnp.einsum("nhwd,de->nhwe", z, params["w2"]) + params["b2"])
    z = jnp.einsum("nhwe,ek->nhwk", z, params["w3"]) + params["b3"]          # (N,H,W,9)
    att = jax.nn.softmax(jnp.mean(z, axis=(1, 2)), axis=-1)                  # (N, 9)
    fused = jnp.einsum("knhwc,nk->nhwc", receptive, att)
    return jnp.where(fused >= 0, fused, params["alpha"] * fused)             # PReLU


def make_params(key, C):
    Cmid = 4 * C
    ks = jax.random.split(key, 7)
    s = 0.1
    return {
        "w1": s * jax.random.normal(ks[0], (C, Cmid), jnp.float32),
        "b1": s * jax.random.normal(ks[1], (Cmid,), jnp.float32),
        "w2": s * jax.random.normal(ks[2], (Cmid, Cmid), jnp.float32),
        "b2": s * jax.random.normal(ks[3], (Cmid,), jnp.float32),
        "w3": s * jax.random.normal(ks[4], (Cmid, NUM_RECEPTIVE), jnp.float32),
        "b3": s * jax.random.normal(ks[5], (NUM_RECEPTIVE,), jnp.float32),
        # nn.PReLU(in_ch, 0) initializes alpha to 0 (== ReLU); use small nonzero
        # values so the negative-slope path of the kernel is exercised.
        "alpha": 0.2 * jax.random.uniform(ks[6], (C,), jnp.float32),
    }


if __name__ == "__main__":
    key = jax.random.PRNGKey(0)
    k_in, k_rec, k_p = jax.random.split(key, 3)

    N, H, W, C = 2, 16, 16, 4
    inp = jax.random.normal(k_in, (N, H, W, C), jnp.float32)
    receptive = jax.random.normal(k_rec, (NUM_RECEPTIVE, N, H, W, C), jnp.float32)
    params = make_params(k_p, C)

    out = jax.block_until_ready(receptive_attention_forward(inp, receptive, params))
    ref = reference_forward(inp, receptive, params)

    assert out.shape == (N, H, W, C)
    assert jnp.allclose(out, ref, atol=1e-4, rtol=1e-4), float(jnp.max(jnp.abs(out - ref)))

    print("KERNEL_OK")
</pallas_src>

<mosaic_0001>
module attributes {stable_mosaic.version = 11 : i64} {
  func.func @receptive_attention_kernel(%arg0: i32, %arg1: i32, %arg2: memref<1x4x256xf32, #tpu.memory_space<vmem>>, %arg3: memref<1x9x8x128xf32, #tpu.memory_space<vmem>>, %arg4: memref<16x4xf32, #tpu.memory_space<vmem>>, %arg5: memref<16x16xf32, #tpu.memory_space<vmem>>, %arg6: memref<9x16xf32, #tpu.memory_space<vmem>>, %arg7: memref<16x2xf32, #tpu.memory_space<vmem>>, %arg8: memref<9x1xf32, #tpu.memory_space<vmem>>, %arg9: memref<1x128xf32, #tpu.memory_space<vmem>>, %arg10: memref<1x8x128xf32, #tpu.memory_space<vmem>>, %arg11: memref<9x128xf32, #tpu.memory_space<vmem>>) attributes {dimension_semantics = [#tpu.dimension_semantics<parallel>, #tpu.dimension_semantics<arbitrary>], iteration_bounds = array<i64: 2, 1>, scalar_prefetch = 0 : i64, scratch_operands = 1 : i64, tpu.core_type = #tpu.core_type<tc>, window_params = [{transform_indices = @transform_0, window_bounds = array<i64: 1, 4, 256>}, {transform_indices = @transform_1, window_bounds = array<i64: 1, 9, 8, 128>}, {pipeline_mode = #tpu.pipeline_mode<synchronous>, transform_indices = @transform_2, window_bounds = array<i64: 16, 4>}, {pipeline_mode = #tpu.pipeline_mode<synchronous>, transform_indices = @transform_3, window_bounds = array<i64: 16, 16>}, {pipeline_mode = #tpu.pipeline_mode<synchronous>, transform_indices = @transform_4, window_bounds = array<i64: 9, 16>}, {pipeline_mode = #tpu.pipeline_mode<synchronous>, transform_indices = @transform_5, window_bounds = array<i64: 16, 2>}, {pipeline_mode = #tpu.pipeline_mode<synchronous>, transform_indices = @transform_6, window_bounds = array<i64: 9, 1>}, {pipeline_mode = #tpu.pipeline_mode<synchronous>, transform_indices = @transform_7, window_bounds = array<i64: 1, 128>}, {transform_indices = @transform_8, window_bounds = array<i64: 1, 8, 128>}]} {
    %c0_i32 = arith.constant 0 : i32
    %0 = arith.cmpi eq, %arg1, %c0_i32 : i32
    %1 = arith.extui %0 : i1 to i32
    %c0_i32_0 = arith.constant 0 : i32
    %2 = arith.cmpi ne, %1, %c0_i32_0 : i32
    scf.if %2 {
      %c0_35 = arith.constant 0 : index
      %c0_36 = arith.constant 0 : index
      %c0_37 = arith.constant 0 : index
      %66 = vector.load %arg2[%c0_35, %c0_36, %c0_37] : memref<1x4x256xf32, #tpu.memory_space<vmem>>, vector<1x4x256xf32>
      %67 = vector.shape_cast %66 : vector<1x4x256xf32> to vector<4x256xf32>
      %c0_38 = arith.constant 0 : index
      %c0_39 = arith.constant 0 : index
      %68 = vector.load %arg7[%c0_38, %c0_39] : memref<16x2xf32, #tpu.memory_space<vmem>>, vector<16x2xf32>
      %c0_40 = arith.constant 0 : index
      %c0_41 = arith.constant 0 : index
      %69 = vector.load %arg4[%c0_40, %c0_41] : memref<16x4xf32, #tpu.memory_space<vmem>>, vector<16x4xf32>
      %cst_42 = arith.constant dense<0.000000e+00> : vector<16x256xf32>
      %70 = tpu.matmul %69, %67, %cst_42 {dimension_numbers = #tpu.dot_dimension_numbers<[1], [0], [0], [1], [0, 0, 1, 1], [], []>} : vector<16x4xf32>, vector<4x256xf32>, vector<16x256xf32> -> vector<16x256xf32>
      %71 = vector.extract_strided_slice %68 {offsets = [0, 0], sizes = [16, 1], strides = [1, 1]} : vector<16x2xf32> to vector<16x1xf32>
      %72 = vector.broadcast %71 : vector<16x1xf32> to vector<16x256xf32>
      %73 = arith.addf %70, %72 : vector<16x256xf32>
      %cst_43 = arith.constant 0.000000e+00 : f32
      %74 = vector.broadcast %cst_43 : f32 to vector<16x256xf32>
      %75 = arith.maximumf %73, %74 : vector<16x256xf32>
      %c0_44 = arith.constant 0 : index
      %c0_45 = arith.constant 0 : index
      %76 = vector.load %arg5[%c0_44, %c0_45] : memref<16x16xf32, #tpu.memory_space<vmem>>, vector<16x16xf32>
      %cst_46 = arith.constant dense<0.000000e+00> : vector<16x256xf32>
      %77 = tpu.matmul %76, %75, %cst_46 {dimension_numbers = #tpu.dot_dimension_numbers<[1], [0], [0], [1], [0, 0, 1, 1], [], []>} : vector<16x16xf32>, vector<16x256xf32>, vector<16x256xf32> -> vector<16x256xf32>
      %78 = vector.extract_strided_slice %68 {offsets = [0, 1], sizes = [16, 1], strides = [1, 1]} : vector<16x2xf32> to vector<16x1xf32>
      %79 = vector.broadcast %78 : vector<16x1xf32> to vector<16x256xf32>
      %80 = arith.addf %77, %79 : vector<16x256xf32>
      %cst_47 = arith.constant 0.000000e+00 : f32
      %81 = vector.broadcast %cst_47 : f32 to vector<16x256xf32>
      %82 = arith.maximumf %80, %81 : vector<16x256xf32>
      %cst_48 = arith.constant dense<0.000000e+00> : vector<16xf32>
      %83 = vector.multi_reduction <add>, %82, %cst_48 [1] : vector<16x256xf32> to vector<16xf32>
      %84 = vector.shape_cast %83 : vector<16xf32> to vector<16x1xf32>
      %cst_49 = arith.constant 2.560000e+02 : f32
      %85 = vector.broadcast %cst_49 : f32 to vector<16x1xf32>
      %86 = arith.divf %84, %85 : vector<16x1xf32>
      %87 = vector.shape_cast %86 : vector<16x1xf32> to vector<16x1xf32>
      %88 = vector.broadcast %87 : vector<16x1xf32> to vector<16x128xf32>
      %c0_50 = arith.constant 0 : index
      %c0_51 = arith.constant 0 : index
      %89 = vector.load %arg6[%c0_50, %c0_51] : memref<9x16xf32, #tpu.memory_space<vmem>>, vector<9x16xf32>
      %cst_52 = arith.constant dense<0.000000e+00> : vector<9x128xf32>
      %90 = tpu.matmul %89, %88, %cst_52 {dimension_numbers = #tpu.dot_dimension_numbers<[1], [0], [0], [1], [0, 0, 1, 1], [], []>} : vector<9x16xf32>, vector<16x128xf32>, vector<9x128xf32> -> vector<9x128xf32>
      %c0_53 = arith.constant 0 : index
      %c0_54 = arith.constant 0 : index
      %91 = vector.load %arg8[%c0_53, %c0_54] : memref<9x1xf32, #tpu.memory_space<vmem>>, vector<9x1xf32>
      %92 = vector.broadcast %91 : vector<9x1xf32> to vector<9x128xf32>
      %93 = arith.addf %90, %92 : vector<9x128xf32>
      %cst_55 = arith.constant dense<0xFF800000> : vector<128xf32>
      %94 = vector.multi_reduction <maximumf>, %93, %cst_55 [0] : vector<9x128xf32> to vector<128xf32>
      %95 = vector.shape_cast %94 : vector<128xf32> to vector<1x128xf32>
      %96 = vector.broadcast %95 : vector<1x128xf32> to vector<9x128xf32>
      %97 = arith.subf %93, %96 : vector<9x128xf32>
      %98 = math.exp %97 : vector<9x128xf32>
      %cst_56 = arith.constant dense<0.000000e+00> : vector<128xf32>
      %99 = vector.multi_reduction <add>, %98, %cst_56 [0] : vector<9x128xf32> to vector<128xf32>
      %100 = vector.shape_cast %99 : vector<128xf32> to vector<1x128xf32>
      %101 = vector.broadcast %100 : vector<1x128xf32> to vector<9x128xf32>
      %102 = arith.divf %98, %101 : vector<9x128xf32>
      %c0_57 = arith.constant 0 : index
      %c0_58 = arith.constant 0 : index
      %103 = vector.load %arg11[%c0_57, %c0_58] : memref<9x128xf32, #tpu.memory_space<vmem>>, vector<9x128xf32>
      tpu.vector_store %arg11[%c0_57, %c0_58], %102 {strides = array<i32>} : memref<9x128xf32, #tpu.memory_space<vmem>>, vector<9x128xf32>,
    } else {
    }
    %c0 = arith.constant 0 : index
    %c0_1 = arith.constant 0 : index
    %3 = vector.load %arg11[%c0, %c0_1] : memref<9x128xf32, #tpu.memory_space<vmem>>, vector<9x128xf32>
    %c0_2 = arith.constant 0 : index
    %c0_3 = arith.constant 0 : index
    %c0_4 = arith.constant 0 : index
    %c0_5 = arith.constant 0 : index
    %4 = vector.load %arg3[%c0_2, %c0_3, %c0_4, %c0_5] : memref<1x9x8x128xf32, #tpu.memory_space<vmem>>, vector<1x1x8x128xf32>
    %5 = vector.shape_cast %4 : vector<1x1x8x128xf32> to vector<8x128xf32>
    %6 = vector.extract_strided_slice %3 {offsets = [0, 0], sizes = [1, 128], strides = [1, 1]} : vector<9x128xf32> to vector<1x128xf32>
    %7 = vector.broadcast %6 : vector<1x128xf32> to vector<8x128xf32>
    %8 = arith.mulf %5, %7 : vector<8x128xf32>
    %c0_6 = arith.constant 0 : index
    %c1 = arith.constant 1 : index
    %c0_7 = arith.constant 0 : index
    %c0_8 = arith.constant 0 : index
    %9 = vector.load %arg3[%c0_6, %c1, %c0_7, %c0_8] : memref<1x9x8x128xf32, #tpu.memory_space<vmem>>, vector<1x1x8x128xf32>
    %10 = vector.shape_cast %9 : vector<1x1x8x128xf32> to vector<8x128xf32>
    %11 = vector.extract_strided_slice %3 {offsets = [1, 0], sizes = [1, 128], strides = [1, 1]} : vector<9x128xf32> to vector<1x128xf32>
    %12 = vector.broadcast %11 : vector<1x128xf32> to vector<8x128xf32>
    %13 = arith.mulf %10, %12 : vector<8x128xf32>
    %14 = arith.addf %8, %13 : vector<8x128xf32>
    %c0_9 = arith.constant 0 : index
    %c2 = arith.constant 2 : index
    %c0_10 = arith.constant 0 : index
    %c0_11 = arith.constant 0 : index
    %15 = vector.load %arg3[%c0_9, %c2, %c0_10, %c0_11] : memref<1x9x8x128xf32, #tpu.memory_space<vmem>>, vector<1x1x8x128xf32>
    %16 = vector.shape_cast %15 : vector<1x1x8x128xf32> to vector<8x128xf32>
    %17 = vector.extract_strided_slice %3 {offsets = [2, 0], sizes = [1, 128], strides = [1, 1]} : vector<9x128xf32> to vector<1x128xf32>
    %18 = vector.broadcast %17 : vector<1x128xf32> to vector<8x128xf32>
    %19 = arith.mulf %16, %18 : vector<8x128xf32>
    %20 = arith.addf %14, %19 : vector<8x128xf32>
    %c0_12 = arith.constant 0 : index
    %c3 = arith.constant 3 : index
    %c0_13 = arith.constant 0 : index
    %c0_14 = arith.constant 0 : index
    %21 = vector.load %arg3[%c0_12, %c3, %c0_13, %c0_14] : memref<1x9x8x128xf32, #tpu.memory_space<vmem>>, vector<1x1x8x128xf32>
    %22 = vector.shape_cast %21 : vector<1x1x8x128xf32> to vector<8x128xf32>
    %23 = vector.extract_strided_slice %3 {offsets = [3, 0], sizes = [1, 128], strides = [1, 1]} : vector<9x128xf32> to vector<1x128xf32>
    %24 = vector.broadcast %23 : vector<1x128xf32> to vector<8x128xf32>
    %25 = arith.mulf %22, %24 : vector<8x128xf32>
    %26 = arith.addf %20, %25 : vector<8x128xf32>
    %c0_15 = arith.constant 0 : index
    %c4 = arith.constant 4 : index
    %c0_16 = arith.constant 0 : index
    %c0_17 = arith.constant 0 : index
    %27 = vector.load %arg3[%c0_15, %c4, %c0_16, %c0_17] : memref<1x9x8x128xf32, #tpu.memory_space<vmem>>, vector<1x1x8x128xf32>
    %28 = vector.shape_cast %27 : vector<1x1x8x128xf32> to vector<8x128xf32>
    %29 = vector.extract_strided_slice %3 {offsets = [4, 0], sizes = [1, 128], strides = [1, 1]} : vector<9x128xf32> to vector<1x128xf32>
    %30 = vector.broadcast %29 : vector<1x128xf32> to vector<8x128xf32>
    %31 = arith.mulf %28, %30 : vector<8x128xf32>
    %32 = arith.addf %26, %31 : vector<8x128xf32>
    %c0_18 = arith.constant 0 : index
    %c5 = arith.constant 5 : index
    %c0_19 = arith.constant 0 : index
    %c0_20 = arith.constant 0 : index
    %33 = vector.load %arg3[%c0_18, %c5, %c0_19, %c0_20] : memref<1x9x8x128xf32, #tpu.memory_space<vmem>>, vector<1x1x8x128xf32>
    %34 = vector.shape_cast %33 : vector<1x1x8x128xf32> to vector<8x128xf32>
    %35 = vector.extract_strided_slice %3 {offsets = [5, 0], sizes = [1, 128], strides = [1, 1]} : vector<9x128xf32> to vector<1x128xf32>
    %36 = vector.broadcast %35 : vector<1x128xf32> to vector<8x128xf32>
    %37 = arith.mulf %34, %36 : vector<8x128xf32>
    %38 = arith.addf %32, %37 : vector<8x128xf32>
    %c0_21 = arith.constant 0 : index
    %c6 = arith.constant 6 : index
    %c0_22 = arith.constant 0 : index
    %c0_23 = arith.constant 0 : index
    %39 = vector.load %arg3[%c0_21, %c6, %c0_22, %c0_23] : memref<1x9x8x128xf32, #tpu.memory_space<vmem>>, vector<1x1x8x128xf32>
    %40 = vector.shape_cast %39 : vector<1x1x8x128xf32> to vector<8x128xf32>
    %41 = vector.extract_strided_slice %3 {offsets = [6, 0], sizes = [1, 128], strides = [1, 1]} : vector<9x128xf32> to vector<1x128xf32>
    %42 = vector.broadcast %41 : vector<1x128xf32> to vector<8x128xf32>
    %43 = arith.mulf %40, %42 : vector<8x128xf32>
    %44 = arith.addf %38, %43 : vector<8x128xf32>
    %c0_24 = arith.constant 0 : index
    %c7 = arith.constant 7 : index
    %c0_25 = arith.constant 0 : index
    %c0_26 = arith.constant 0 : index
    %45 = vector.load %arg3[%c0_24, %c7, %c0_25, %c0_26] : memref<1x9x8x128xf32, #tpu.memory_space<vmem>>, vector<1x1x8x128xf32>
    %46 = vector.shape_cast %45 : vector<1x1x8x128xf32> to vector<8x128xf32>
    %47 = vector.extract_strided_slice %3 {offsets = [7, 0], sizes = [1, 128], strides = [1, 1]} : vector<9x128xf32> to vector<1x128xf32>
    %48 = vector.broadcast %47 : vector<1x128xf32> to vector<8x128xf32>
    %49 = arith.mulf %46, %48 : vector<8x128xf32>
    %50 = arith.addf %44, %49 : vector<8x128xf32>
    %c0_27 = arith.constant 0 : index
    %c8 = arith.constant 8 : index
    %c0_28 = arith.constant 0 : index
    %c0_29 = arith.constant 0 : index
    %51 = vector.load %arg3[%c0_27, %c8, %c0_28, %c0_29] : memref<1x9x8x128xf32, #tpu.memory_space<vmem>>, vector<1x1x8x128xf32>
    %52 = vector.shape_cast %51 : vector<1x1x8x128xf32> to vector<8x128xf32>
    %53 = vector.extract_strided_slice %3 {offsets = [8, 0], sizes = [1, 128], strides = [1, 1]} : vector<9x128xf32> to vector<1x128xf32>
    %54 = vector.broadcast %53 : vector<1x128xf32> to vector<8x128xf32>
    %55 = arith.mulf %52, %54 : vector<8x128xf32>
    %56 = arith.addf %50, %55 : vector<8x128xf32>
    %c0_30 = arith.constant 0 : index
    %c0_31 = arith.constant 0 : index
    %57 = vector.load %arg9[%c0_30, %c0_31] : memref<1x128xf32, #tpu.memory_space<vmem>>, vector<1x128xf32>
    %cst = arith.constant 0.000000e+00 : f32
    %58 = vector.broadcast %cst : f32 to vector<8x128xf32>
    %59 = arith.cmpf oge, %56, %58 : vector<8x128xf32>
    %60 = vector.broadcast %57 : vector<1x128xf32> to vector<8x128xf32>
    %61 = arith.mulf %60, %56 : vector<8x128xf32>
    %62 = arith.select %59, %56, %61 : vector<8x128xi1>, vector<8x128xf32>
    %c0_32 = arith.constant 0 : index
    %c0_33 = arith.constant 0 : index
    %c0_34 = arith.constant 0 : index
    %63 = vector.load %arg10[%c0_32, %c0_33, %c0_34] : memref<1x8x128xf32, #tpu.memory_space<vmem>>, vector<1x8x128xf32>
    %64 = vector.shape_cast %63 : vector<1x8x128xf32> to vector<8x128xf32>
    %65 = vector.shape_cast %62 : vector<8x128xf32> to vector<1x8x128xf32>
    tpu.vector_store %arg10[%c0_32, %c0_33, %c0_34], %65 {strides = array<i32>} : memref<1x8x128xf32, #tpu.memory_space<vmem>>, vector<1x8x128xf32>,
    return
  }
  func.func @transform_0(%arg0: i32, %arg1: i32) -> (i32, i32, i32) {
    %c0_i32 = arith.constant 0 : i32
    %c0_i32_0 = arith.constant 0 : i32
    %c0_i32_1 = arith.constant 0 : i32
    return %arg0, %c0_i32, %c0_i32_0 : i32, i32, i32
  }
  func.func @transform_1(%arg0: i32, %arg1: i32) -> (i32, i32, i32, i32) {
    %c0_i32 = arith.constant 0 : i32
    %c0_i32_0 = arith.constant 0 : i32
    %c0_i32_1 = arith.constant 0 : i32
    return %arg0, %c0_i32, %arg1, %c0_i32_0 : i32, i32, i32, i32
  }
  func.func @transform_2(%arg0: i32, %arg1: i32) -> (i32, i32) {
    %c0_i32 = arith.constant 0 : i32
    %c0_i32_0 = arith.constant 0 : i32
    %c0_i32_1 = arith.constant 0 : i32
    return %c0_i32, %c0_i32_0 : i32, i32
  }
  func.func @transform_3(%arg0: i32, %arg1: i32) -> (i32, i32) {
    %c0_i32 = arith.constant 0 : i32
    %c0_i32_0 = arith.constant 0 : i32
    %c0_i32_1 = arith.constant 0 : i32
    return %c0_i32, %c0_i32_0 : i32, i32
  }
  func.func @transform_4(%arg0: i32, %arg1: i32) -> (i32, i32) {
    %c0_i32 = arith.constant 0 : i32
    %c0_i32_0 = arith.constant 0 : i32
    %c0_i32_1 = arith.constant 0 : i32
    return %c0_i32, %c0_i32_0 : i32, i32
  }
  func.func @transform_5(%arg0: i32, %arg1: i32) -> (i32, i32) {
    %c0_i32 = arith.constant 0 : i32
    %c0_i32_0 = arith.constant 0 : i32
    %c0_i32_1 = arith.constant 0 : i32
    return %c0_i32, %c0_i32_0 : i32, i32
  }
  func.func @transform_6(%arg0: i32, %arg1: i32) -> (i32, i32) {
    %c0_i32 = arith.constant 0 : i32
    %c0_i32_0 = arith.constant 0 : i32
    %c0_i32_1 = arith.constant 0 : i32
    return %c0_i32, %c0_i32_0 : i32, i32
  }
  func.func @transform_7(%arg0: i32, %arg1: i32) -> (i32, i32) {
    %c0_i32 = arith.constant 0 : i32
    %c0_i32_0 = arith.constant 0 : i32
    %c0_i32_1 = arith.constant 0 : i32
    return %c0_i32, %c0_i32_0 : i32, i32
  }
  func.func @transform_8(%arg0: i32, %arg1: i32) -> (i32, i32, i32) {
    %c0_i32 = arith.constant 0 : i32
    %c0_i32_0 = arith.constant 0 : i32
    return %arg0, %arg1, %c0_i32 : i32, i32, i32
  }
}

</mosaic_0001>

<llo_original>
// kernel: tpu_custom_call.1
$region0: #{tpu_custom_call.1}
  #allocation0 [shape = 'u32[]', space=smem, size = 0x4, offset = 0x4, fixed_abs, tag = 'smem constant byte address 0x4 - core index']
  #allocation1 [shape = 'u32[144,128]{1,0:T(1,128)}', space=vmem, size = 0x12000, scoped, tag = 'internal scratch']
  #allocation2 [shape = 'f32[9,128]{1,0:T(8,128)}', space=vmem, size = 0x2000, scoped, tag = 'scratch operand']
  %s0 = inlined_call_operand.vmem [shape: f32[2,4,256], index: 0, kind: input, shape index: {}]
  %s1 = inlined_call_operand.hbm [shape: f32[2,9,8,128], index: 1, kind: input, shape index: {}]
  %s2 = inlined_call_operand.vmem [shape: f32[16,4], index: 2, kind: input, shape index: {}]
  %s3 = inlined_call_operand.vmem [shape: f32[16,16], index: 3, kind: input, shape index: {}]
  %s4 = inlined_call_operand.vmem [shape: f32[9,16], index: 4, kind: input, shape index: {}]
  %s5 = inlined_call_operand.vmem [shape: f32[16,2], index: 5, kind: input, shape index: {}]
  %s6 = inlined_call_operand.vmem [shape: f32[9,1], index: 6, kind: input, shape index: {}]
  %s7 = inlined_call_operand.vmem [shape: f32[1,128], index: 7, kind: input, shape index: {}]
  %s8 = inlined_call_operand.hbm [shape: f32[2,8,128], index: 8, kind: output, shape index: {}]
  %s9 = sld [smem:[#allocation0]]
  $region73: #{tpu_custom_call.1} parent=0
    _
  %s11 = ssub.s32 1, %s9
  %s12 = scalar_select 0, %s11, %s9
  $region1: #{tpu_custom_call.1} parent=0
    #allocation3 [shape = 'u8[73728]{0}', space=vmem, size = 0x12000, scoped, tag = 'input window, operand 1']
    #allocation4 [shape = 's32[2]{0}', space=sflag, size = 0x8, scoped, tag = 'scoped memory for tpu_custom_call.1']
    #allocation5 [shape = 's32[2]{0}', space=sflag, size = 0x8, scoped, tag = 'scoped memory for tpu_custom_call.1']
    #allocation6 [shape = 'u8[8192]{0}', space=vmem, size = 0x2000, scoped, tag = 'output window, operand 0']
    %13 = vsyncpa [#allocation4], 0
    %s14 = scalar_lea.sflag [#allocation4], 1
    %15 = vsyncpa %s14, 0
    %16 = vsyncpa [#allocation5], 0
    %s17 = scalar_lea.sflag [#allocation5], 1
    %18 = vsyncpa %s17, 0
    loop: start=0, step=1, limit=4
    $region2: #{tpu_custom_call.1} parent=1 // loop_pre_header
      _
    $region3: #{tpu_custom_call.1} parent=1 // loop_header
      %s20 = sphi 0, %s24
      %p21 = scmp.ge.s32.totalorder %s20, 4
      %s27 = sphi 0, %s39
      %s28 = sphi 0, %s35
      %s29 = sphi 0, %s27
      %s30 = sphi 0, %s28
      %s31 = sphi 0, %s29
      %s32 = sphi 0, %s30
      %s42 = sphi 0, %s44
      %s45 = sphi 0, %s42
      %s46 = sphi 0, %s45
      %s62 = sphi 0, %s46
      %s70 = sphi 0, %s72
      %s73 = sphi 0, %s70
      %s74 = sphi 0, %s73
      %s90 = sphi 0, %s74
      %s94 = sphi 0, %s94
      %s96 = sphi 0, %s94
      %s97 = sphi 0, %s96
      %s111 = sphi 0, %s97
      %s115 = sphi 0, %s115
      %s117 = sphi 0, %s115
      %s118 = sphi 0, %s117
      %s132 = sphi 0, %s118
      %s136 = sphi 0, %s136
      %s138 = sphi 0, %s136
      %s139 = sphi 0, %s138
      %s153 = sphi 0, %s139
      %s157 = sphi 0, %s157
      %s159 = sphi 0, %s157
      %s160 = sphi 0, %s159
      %s174 = sphi 0, %s160
      %s178 = sphi 0, %s178
      %s180 = sphi 0, %s178
      %s181 = sphi 0, %s180
      %s195 = sphi 0, %s181
      %s199 = sphi 0, %s199
      %s201 = sphi 0, %s199
      %s202 = sphi 0, %s201
      %s216 = sphi 0, %s202
      %s224 = sphi 0, %s226
      %s227 = sphi 0, %s224
      %s228 = sphi 0, %s227
      %s244 = sphi 0, %s228
    $region4: #{tpu_custom_call.1} parent=1 // loop_header_branch
      %23 = sbr.rel (%p21) target = $region8
    $region5: #{tpu_custom_call.1} parent=1 // loop_body
      %s25 = ssub.s32 %s20, 1
      %s26 = ssub.s32 %s20, 2
      %s33 = sadd.s32 1, %s28
      %p34 = scmp.ge.s32.totalorder %s33, 1
      %s35 = scalar_select %p34, 0, %s33
      %s36 = sadd.s32 1, %s27
      %s37 = scalar_select %p34, %s36, %s27
      %p38 = scmp.ge.s32.totalorder %s37, 2
      %s39 = scalar_select %p38, 0, %s37
      %s40 = ssub.s32 %s27, %s39
      %p41 = scmp.eq.s32.totalorder %s40, 0
      %s43 = sadd.s32 %s42, 1
      %s44 = scalar_select %p41, %s42, %s43
      %p47 = pneg %p41
      %p48 = scmp.eq.s32.totalorder %s20, 1
      %p49 = por %p47, %p48
      %p50 = scmp.ne.s32.totalorder %s42, %s45
      %p51 = scmp.eq.s32.totalorder %s20, 0
      %p52 = por %p50, %p51
      %p53 = scmp.ne.s32.totalorder %s42, %s45
      %p54 = scmp.eq.s32.totalorder %s25, 1
      %p55 = por %p53, %p54
      %p56 = scmp.ne.s32.totalorder %s45, %s46
      %p57 = scmp.eq.s32.totalorder %s25, 0
      %p58 = por %p56, %p57
      %p59 = scmp.ne.s32.totalorder %s45, %s46
      %p60 = scmp.eq.s32.totalorder %s26, 1
      %p61 = por %p59, %p60
      %p63 = scmp.ne.s32.totalorder %s46, %s62
      %p64 = scmp.eq.s32.totalorder %s26, 0
      %p65 = por %p63, %p64
      %s66 = ssub.s32 %s27, %s39
      %s67 = ssub.s32 %s28, %s35
      %s68 = sor.u32 %s66, %s67
      %p69 = scmp.eq.s32.totalorder %s68, 0
      %s71 = sadd.s32 %s70, 1
      %s72 = scalar_select %p69, %s70, %s71
      %p75 = pneg %p69
      %p76 = scmp.eq.s32.totalorder %s20, 1
      %p77 = por %p75, %p76
      %p78 = scmp.ne.s32.totalorder %s70, %s73
      %p79 = scmp.eq.s32.totalorder %s20, 0
      %p80 = por %p78, %p79
      %p81 = scmp.ne.s32.totalorder %s70, %s73
      %p82 = scmp.eq.s32.totalorder %s25, 1
      %p83 = por %p81, %p82
      %p84 = scmp.ne.s32.totalorder %s73, %s74
      %p85 = scmp.eq.s32.totalorder %s25, 0
      %p86 = por %p84, %p85
      %p87 = scmp.ne.s32.totalorder %s73, %s74
      %p88 = scmp.eq.s32.totalorder %s26, 1
      %p89 = por %p87, %p88
      %p91 = scmp.ne.s32.totalorder %s74, %s90
      %p92 = scmp.eq.s32.totalorder %s26, 0
      %p93 = por %p91, %p92
      %s95 = sadd.s32 %s94, 1
      %p98 = scmp.eq.s32.totalorder %s20, 1
      %p99 = scmp.ne.s32.totalorder %s94, %s96
      %p100 = scmp.eq.s32.totalorder %s20, 0
      %p101 = por %p99, %p100
      %p102 = scmp.ne.s32.totalorder %s94, %s96
      %p103 = scmp.eq.s32.totalorder %s25, 1
      %p104 = por %p102, %p103
      %p105 = scmp.ne.s32.totalorder %s96, %s97
      %p106 = scmp.eq.s32.totalorder %s25, 0
      %p107 = por %p105, %p106
      %p108 = scmp.ne.s32.totalorder %s96, %s97
      %p109 = scmp.eq.s32.totalorder %s26, 1
      %p110 = por %p108, %p109
      %p112 = scmp.ne.s32.totalorder %s97, %s111
      %p113 = scmp.eq.s32.totalorder %s26, 0
      %p114 = por %p112, %p113
      %s116 = sadd.s32 %s115, 1
      %p119 = scmp.eq.s32.totalorder %s20, 1
      %p120 = scmp.ne.s32.totalorder %s115, %s117
      %p121 = scmp.eq.s32.totalorder %s20, 0
      %p122 = por %p120, %p121
      %p123 = scmp.ne.s32.totalorder %s115, %s117
      %p124 = scmp.eq.s32.totalorder %s25, 1
      %p125 = por %p123, %p124
      %p126 = scmp.ne.s32.totalorder %s117, %s118
      %p127 = scmp.eq.s32.totalorder %s25, 0
      %p128 = por %p126, %p127
      %p129 = scmp.ne.s32.totalorder %s117, %s118
      %p130 = scmp.eq.s32.totalorder %s26, 1
      %p131 = por %p129, %p130
      %p133 = scmp.ne.s32.totalorder %s118, %s132
      %p134 = scmp.eq.s32.totalorder %s26, 0
      %p135 = por %p133, %p134
      %s137 = sadd.s32 %s136, 1
      %p140 = scmp.eq.s32.totalorder %s20, 1
      %p141 = scmp.ne.s32.totalorder %s136, %s138
      %p142 = scmp.eq.s32.totalorder %s20, 0
      %p143 = por %p141, %p142
      %p144 = scmp.ne.s32.totalorder %s136, %s138
      %p145 = scmp.eq.s32.totalorder %s25, 1
      %p146 = por %p144, %p145
      %p147 = scmp.ne.s32.totalorder %s138, %s139
      %p148 = scmp.eq.s32.totalorder %s25, 0
      %p149 = por %p147, %p148
      %p150 = scmp.ne.s32.totalorder %s138, %s139
      %p151 = scmp.eq.s32.totalorder %s26, 1
      %p152 = por %p150, %p151
      %p154 = scmp.ne.s32.totalorder %s139, %s153
      %p155 = scmp.eq.s32.totalorder %s26, 0
      %p156 = por %p154, %p155
      %s158 = sadd.s32 %s157, 1
      %p161 = scmp.eq.s32.totalorder %s20, 1
      %p162 = scmp.ne.s32.totalorder %s157, %s159
      %p163 = scmp.eq.s32.totalorder %s20, 0
      %p164 = por %p162, %p163
      %p165 = scmp.ne.s32.totalorder %s157, %s159
      %p166 = scmp.eq.s32.totalorder %s25, 1
      %p167 = por %p165, %p166
      %p168 = scmp.ne.s32.totalorder %s159, %s160
      %p169 = scmp.eq.s32.totalorder %s25, 0
      %p170 = por %p168, %p169
      %p171 = scmp.ne.s32.totalorder %s159, %s160
      %p172 = scmp.eq.s32.totalorder %s26, 1
      %p173 = por %p171, %p172
      %p175 = scmp.ne.s32.totalorder %s160, %s174
      %p176 = scmp.eq.s32.totalorder %s26, 0
      %p177 = por %p175, %p176
      %s179 = sadd.s32 %s178, 1
      %p182 = scmp.eq.s32.totalorder %s20, 1
      %p183 = scmp.ne.s32.totalorder %s178, %s180
      %p184 = scmp.eq.s32.totalorder %s20, 0
      %p185 = por %p183, %p184
      %p186 = scmp.ne.s32.totalorder %s178, %s180
      %p187 = scmp.eq.s32.totalorder %s25, 1
      %p188 = por %p186, %p187
      %p189 = scmp.ne.s32.totalorder %s180, %s181
      %p190 = scmp.eq.s32.totalorder %s25, 0
      %p191 = por %p189, %p190
      %p192 = scmp.ne.s32.totalorder %s180, %s181
      %p193 = scmp.eq.s32.totalorder %s26, 1
      %p194 = por %p192, %p193
      %p196 = scmp.ne.s32.totalorder %s181, %s195
      %p197 = scmp.eq.s32.totalorder %s26, 0
      %p198 = por %p196, %p197
      %s200 = sadd.s32 %s199, 1
      %p203 = scmp.eq.s32.totalorder %s20, 1
      %p204 = scmp.ne.s32.totalorder %s199, %s201
      %p205 = scmp.eq.s32.totalorder %s20, 0
      %p206 = por %p204, %p205
      %p207 = scmp.ne.s32.totalorder %s199, %s201
      %p208 = scmp.eq.s32.totalorder %s25, 1
      %p209 = por %p207, %p208
      %p210 = scmp.ne.s32.totalorder %s201, %s202
      %p211 = scmp.eq.s32.totalorder %s25, 0
      %p212 = por %p210, %p211
      %p213 = scmp.ne.s32.totalorder %s201, %s202
      %p214 = scmp.eq.s32.totalorder %s26, 1
      %p215 = por %p213, %p214
      %p217 = scmp.ne.s32.totalorder %s202, %s216
      %p218 = scmp.eq.s32.totalorder %s26, 0
      %p219 = por %p217, %p218
      %s220 = ssub.s32 %s27, %s39
      %s221 = ssub.s32 %s28, %s35
      %s222 = sor.u32 %s220, %s221
      %p223 = scmp.eq.s32.totalorder %s222, 0
      %s225 = sadd.s32 %s224, 1
      %s226 = scalar_select %p223, %s224, %s225
      %p229 = pneg %p223
      %p230 = scmp.eq.s32.totalorder %s20, 1
      %p231 = por %p229, %p230
      %p232 = scmp.ne.s32.totalorder %s224, %s227
      %p233 = scmp.eq.s32.totalorder %s20, 0
      %p234 = por %p232, %p233
      %p235 = scmp.ne.s32.totalorder %s224, %s227
      %p236 = scmp.eq.s32.totalorder %s25, 1
      %p237 = por %p235, %p236
      %p238 = scmp.ne.s32.totalorder %s227, %s228
      %p239 = scmp.eq.s32.totalorder %s25, 0
      %p240 = por %p238, %p239
      %p241 = scmp.ne.s32.totalorder %s227, %s228
      %p242 = scmp.eq.s32.totalorder %s26, 1
      %p243 = por %p241, %p242
      %p245 = scmp.ne.s32.totalorder %s228, %s244
      %p246 = scmp.eq.s32.totalorder %s26, 0
      %p247 = por %p245, %p246
      %p248 = scmp.le.s32.totalorder 1, %s20
      %p249 = scmp.lt.s32.totalorder %s20, 3
      %p250 = pnand %p248, %p249
      %p251 = pneg %p250
      // Predicated region
      $region9: #{tpu_custom_call.1} parent=5 // pred_check
        _
      $region10: #{tpu_custom_call.1} parent=5 // pred_check_branch
        %253 = sbr.rel (%p250) target = $region12
      $region11: #{tpu_custom_call.1} parent=5 // pred_region
        %s254 = ssub.s32 %s20, 1
        // Predicated region
        $region13: #{tpu_custom_call.1} parent=11 // pred_check
          %p255 = pneg %p107
        $region14: #{tpu_custom_call.1} parent=11 // pred_check_branch
          %257 = sbr.rel (%p255) target = $region16
        $region15: #{tpu_custom_call.1} parent=11 // pred_region
          _
        $region16: #{tpu_custom_call.1} parent=11 // pred_fallthru
          _
        // Predicated region
        $region17: #{tpu_custom_call.1} parent=11 // pred_check
          %p258 = pneg %p128
        $region18: #{tpu_custom_call.1} parent=11 // pred_check_branch
          %260 = sbr.rel (%p258) target = $region20
        $region19: #{tpu_custom_call.1} parent=11 // pred_region
          _
        $region20: #{tpu_custom_call.1} parent=11 // pred_fallthru
          _
        // Predicated region
        $region21: #{tpu_custom_call.1} parent=11 // pred_check
          %p261 = pneg %p149
        $region22: #{tpu_custom_call.1} parent=11 // pred_check_branch
          %263 = sbr.rel (%p261) target = $region24
        $region23: #{tpu_custom_call.1} parent=11 // pred_region
          _
        $region24: #{tpu_custom_call.1} parent=11 // pred_fallthru
          _
        // Predicated region
        $region25: #{tpu_custom_call.1} parent=11 // pred_check
          %p264 = pneg %p170
        $region26: #{tpu_custom_call.1} parent=11 // pred_check_branch
          %266 = sbr.rel (%p264) target = $region28
        $region27: #{tpu_custom_call.1} parent=11 // pred_region
          _
        $region28: #{tpu_custom_call.1} parent=11 // pred_fallthru
          _
        // Predicated region
        $region29: #{tpu_custom_call.1} parent=11 // pred_check
          %p267 = pneg %p191
        $region30: #{tpu_custom_call.1} parent=11 // pred_check_branch
          %269 = sbr.rel (%p267) target = $region32
        $region31: #{tpu_custom_call.1} parent=11 // pred_region
          _
        $region32: #{tpu_custom_call.1} parent=11 // pred_fallthru
          _
        // Predicated region
        $region33: #{tpu_custom_call.1} parent=11 // pred_check
          %p270 = pneg %p212
        $region34: #{tpu_custom_call.1} parent=11 // pred_check_branch
          %272 = sbr.rel (%p270) target = $region36
        $region35: #{tpu_custom_call.1} parent=11 // pred_region
          _
        $region36: #{tpu_custom_call.1} parent=11 // pred_fallthru
          _
      $region12: #{tpu_custom_call.1} parent=5 // pred_fallthru
        _
      %p273 = scmp.lt.s32.totalorder %s20, 2
      // Predicated region
      $region37: #{tpu_custom_call.1} parent=5 // pred_check
        %p274 = pneg %p273
      $region38: #{tpu_custom_call.1} parent=5 // pred_check_branch
        %276 = sbr.rel (%p274) target = $region40
      $region39: #{tpu_custom_call.1} parent=5 // pred_region
        // Predicated region
        $region41: #{tpu_custom_call.1} parent=39 // pred_check
          %p277 = pneg %p52
        $region42: #{tpu_custom_call.1} parent=39 // pred_check_branch
          %279 = sbr.rel (%p277) target = $region44
        $region43: #{tpu_custom_call.1} parent=39 // pred_region
          %p280 = scmp.lt.s32.totalorder %s27, 1
          %s281 = scalar_select %p280, %s27, 1
          %s282 = smul.addr %s281, 2
          %s283 = smul.addr %s282, 4
          %s284 = scalar_lea.vmem %s0, %s283
        $region44: #{tpu_custom_call.1} parent=39 // pred_fallthru
          _
        // Predicated region
        $region45: #{tpu_custom_call.1} parent=39 // pred_check
          %p285 = pneg %p80
        $region46: #{tpu_custom_call.1} parent=39 // pred_check_branch
          %287 = sbr.rel (%p285) target = $region48
        $region47: #{tpu_custom_call.1} parent=39 // pred_region
          %s288 = sand.u32 %s70, 1
          %s289 = scalar_lea.sflag [#allocation4], %s288
          %s290 = sand.u32 %s70, 1
          %s291 = smul.addr %s290, 72
          %s292 = scalar_lea.vmem [#allocation3], %s291
          %s294 = ssub.s32 1152, 1152
          %295 = vsyncadd %s289, %s294
          %s296 = smul.addr %s27, 9
          %s297 = sadd.s32 %s28, %s296
          %s298 = smul.addr %s297, 128
          %s299 = scalar_lea.hbm %s1, %s298
          %s300 = sshll.u32 %s292, 4
          %s301 = int_to_ptr.vmem [resolvable:$true] %s300
          %306 = dma.hbm_to_vmem [thread:$0]  %s299, 1152, %s301, %s289, 128, 128, 8
        $region48: #{tpu_custom_call.1} parent=39 // pred_fallthru
          _
      $region40: #{tpu_custom_call.1} parent=5 // pred_fallthru
        _
      %p307 = scmp.le.s32.totalorder 1, %s20
      %p308 = scmp.lt.s32.totalorder %s20, 3
      %p309 = pnand %p307, %p308
      %p310 = pneg %p309
      // Predicated region
      $region49: #{tpu_custom_call.1} parent=5 // pred_check
        _
      $region50: #{tpu_custom_call.1} parent=5 // pred_check_branch
        %312 = sbr.rel (%p309) target = $region52
      $region51: #{tpu_custom_call.1} parent=5 // pred_region
        %s313 = ssub.s32 %s20, 1
        %s314 = sand.u32 %s73, 1
        %s315 = scalar_lea.sflag [#allocation4], %s314
        %s316 = sand.u32 %s73, 1
        %s317 = smul.addr %s316, 72
        %s318 = scalar_lea.vmem [#allocation3], %s317
        // Predicated region
        $region53: #{tpu_custom_call.1} parent=51 // pred_check
          %p319 = pneg %p86
        $region54: #{tpu_custom_call.1} parent=51 // pred_check_branch
          %321 = sbr.rel (%p319) target = $region56
        $region55: #{tpu_custom_call.1} parent=51 // pred_region
          %322 = dma.done %s315, 1152
        $region56: #{tpu_custom_call.1} parent=51 // pred_fallthru
          _
        %p323 = scmp.lt.s32.totalorder %s29, 1
        %s324 = scalar_select %p323, %s29, 1
        %s325 = smul.addr %s324, 2
        %s326 = smul.addr %s325, 4
        %s327 = scalar_lea.vmem %s0, %s326
        %p328 = pneg %p58
        %p329 = pneg %p55
        %s330 = sand.u32 %s73, 1
        %s331 = scalar_lea.sflag [#allocation4], %s330
        %s332 = sand.u32 %s73, 1
        %s333 = smul.addr %s332, 72
        %s334 = scalar_lea.vmem [#allocation3], %s333
        %p335 = pneg %p86
        %p336 = pneg %p83
        %p337 = pneg %p107
        %p338 = pneg %p104
        %p339 = pneg %p128
        %p340 = pneg %p125
        %p341 = pneg %p149
        %p342 = pneg %p146
        %p343 = pneg %p170
        %p344 = pneg %p167
        %p345 = pneg %p191
        %p346 = pneg %p188
        %p347 = pneg %p212
        %p348 = pneg %p209
        %p349 = pneg %p240
        %p350 = pneg %p237
        %s351 = sand.u32 %s227, 1
        %s352 = scalar_lea.sflag [#allocation5], %s351
        %s353 = sand.u32 %s227, 1
        %s354 = smul.addr %s353, 8
        %s355 = scalar_lea.vmem [#allocation6], %s354
        %p356 = scmp.lt.s32.totalorder %s29, 1
        %s357 = scalar_select %p356, %s29, 1
        %s358 = smul.addr %s357, 2
        %s359 = smul.addr %s358, 4
        %s360 = scalar_lea.vmem %s0, %s359
        %p361 = scmp.eq.s32.totalorder %s30, 0
        // Predicated region
        $region57: #{tpu_custom_call.1} parent=51 // pred_check
          %p362 = pneg %p361
        $region58: #{tpu_custom_call.1} parent=51 // pred_check_branch
          %364 = sbr.rel (%p362) target = $region60
        $region59: #{tpu_custom_call.1} parent=51 // pred_region
          %v365 = vld [vmem:[%s360] sm:$0xff]
          %v366 = vld [vmem:[%s5] sm:$0xff]
          %v367 = vld [vmem:[%s5 + $0x8] sm:$0xff]
          %v368 = vld [vmem:[%s2] sm:$0xff]
          %v369 = vld [vmem:[%s2 + $0x8] sm:$0xff]
          %371 = vset.pattern.permute.xlu0 0
          %372 = vperm.xlu0 %371, %v366
          %v373 = vpop.permute.xlu0 %372
          %376 = vset.pattern.permute.xlu0 0
          %377 = vperm.xlu0 %376, %v367
          %v378 = vpop.permute.xlu0 %377
          %v381 = vcombine.high %v365, %v365
          %vm382 = vcmask 31744
          %v384 = vsel %vm382, %v368, 0
          %v387 = vsel %vm382, %v369, 0
          %vm389 = vcmask 1043456
          %v390 = vsel %vm389, %v365, 0
          %v392 = vsel %vm389, %v381, 0
          %394 = vmatprep.subr.mxu0 %v392
          %395 = vmatpush1.msra.mxu0 %v390
          %396 = vmatprep.subr.mxu0 0.0
          %397 = vmatpush1.msra.mxu0 0.0
          %398 = vmatprep.subr.mxu0 0.0
          %399 = vmatpush1.msra.mxu0 0.0
          %400 = vmatprep.subr.mxu0 0.0
          %401 = vmatpush1.msra.mxu0 0.0
          %402 = vmatprep.subr.mxu0 0.0
          %403 = vmatpush1.msra.mxu0 0.0
          %404 = vmatprep.subr.mxu0 0.0
          %405 = vmatpush1.msra.mxu0 0.0
          %406 = vmatprep.subr.mxu0 0.0
          %407 = vmatpush1.msra.mxu0 0.0
          %408 = vmatprep.subr.mxu0 0.0
          %409 = vmatpush1.msra.mxu0 0.0
          %410 = vmatprep.subr.mxu0 0.0
          %411 = vmatpush1.msra.mxu0 0.0
          %412 = vmatprep.subr.mxu0 0.0
          %413 = vmatpush1.msra.mxu0 0.0
          %414 = vmatprep.subr.mxu0 0.0
          %415 = vmatpush1.msra.mxu0 0.0
          %416 = vmatprep.subr.mxu0 0.0
          %417 = vmatpush1.msra.mxu0 0.0
          %418 = vmatprep.subr.mxu0 0.0
          %419 = vmatpush1.msra.mxu0 0.0
          %420 = vmatprep.subr.mxu0 0.0
          %421 = vmatpush1.msra.mxu0 0.0
          %422 = vmatprep.subr.mxu0 0.0
          %423 = vmatpush1.msra.mxu0 0.0
          %424 = vmatprep.subr.mxu0 0.0
          %425 = vmatpush1.msra.mxu0 0.0
          %426 = vmatprep.subr.mxu0 0.0
          %427 = vmatpush1.msra.mxu0 0.0
          %428 = vmatprep.subr.mxu0 0.0
          %429 = vmatpush1.msra.mxu0 0.0
          %430 = vmatprep.subr.mxu0 0.0
          %431 = vmatpush1.msra.mxu0 0.0
          %432 = vmatprep.subr.mxu0 0.0
          %433 = vmatpush1.msra.mxu0 0.0
          %434 = vmatprep.subr.mxu0 0.0
          %435 = vmatpush1.msra.mxu0 0.0
          %436 = vmatprep.subr.mxu0 0.0
          %437 = vmatpush1.msra.mxu0 0.0
          %438 = vmatprep.subr.mxu0 0.0
          %439 = vmatpush1.msra.mxu0 0.0
          %440 = vmatprep.subr.mxu0 0.0
          %441 = vmatpush1.msra.mxu0 0.0
          %442 = vmatprep.subr.mxu0 0.0
          %443 = vmatpush1.msra.mxu0 0.0
          %444 = vmatprep.subr.mxu0 0.0
          %445 = vmatpush1.msra.mxu0 0.0
          %446 = vmatprep.subr.mxu0 0.0
          %447 = vmatpush1.msra.mxu0 0.0
          %448 = vmatprep.subr.mxu0 0.0
          %449 = vmatpush1.msra.mxu0 0.0
          %450 = vmatprep.subr.mxu0 0.0
          %451 = vmatpush1.msra.mxu0 0.0
          %452 = vmatprep.subr.mxu0 0.0
          %453 = vmatpush1.msra.mxu0 0.0
          %454 = vmatprep.subr.mxu0 0.0
          %455 = vmatpush1.msra.mxu0 0.0
          %456 = vmatprep.subr.mxu0 0.0
          %457 = vmatpush1.msra.mxu0 0.0
          %458 = vmatprep.mubr.f32.mxu0 0.0
          %459 = vmatmul.mubr.f32.gmra.mrb[0].mxu0 %v384
          %v460 = vpop.f32.mrb[0].mxu0
          %v461 = vadd.f32 %v373, %v460
          %v462 = vpop.f32.mrb[0].mxu0
          %v463 = vadd.f32 %v373, %v462
          %464 = vmatprep.mubr.f32.mxu0 0.0
          %465 = vmatmul.mubr.f32.gmra.mrb[0].mxu0 %v387
          %v466 = vpop.f32.mrb[0].mxu0
          %v467 = vadd.f32 %v378, %v466
          %v468 = vpop.f32.mrb[0].mxu0
          %v469 = vadd.f32 %v378, %v468
          %470 = vdwg.mxu0
          %v471 = vmax.f32 %v461, 0.0
          %v472 = vmax.f32 %v463, 0.0
          %v473 = vmax.f32 %v467, 0.0
          %v474 = vmax.f32 %v469, 0.0
          %v475 = vld [vmem:[%s3] sm:$0xff]
          %v476 = vld [vmem:[%s3 + $0x8] sm:$0xff]
          %477 = vset.pattern.permute.xlu0 1
          %478 = vperm.xlu0 %477, %v366
          %v479 = vpop.permute.xlu0 %478
          %481 = vset.pattern.permute.xlu0 1
          %482 = vperm.xlu0 %481, %v367
          %v483 = vpop.permute.xlu0 %482
          %vm485 = vcmask 130048
          %v487 = vsel %vm485, %v475, 0
          %v490 = vsel %vm485, %v476, 0
          %492 = vmatprep.subr.mxu0 %v472
          %493 = vmatpush1.msra.mxu0 %v471
          %494 = vmatprep.subr.mxu0 %v474
          %495 = vmatpush1.msra.mxu0 %v473
          %496 = vmatprep.subr.mxu0 0.0
          %497 = vmatpush1.msra.mxu0 0.0
          %498 = vmatprep.subr.mxu0 0.0
          %499 = vmatpush1.msra.mxu0 0.0
          %500 = vmatprep.subr.mxu0 0.0
          %501 = vmatpush1.msra.mxu0 0.0
          %502 = vmatprep.subr.mxu0 0.0
          %503 = vmatpush1.msra.mxu0 0.0
          %504 = vmatprep.subr.mxu0 0.0
          %505 = vmatpush1.msra.mxu0 0.0
          %506 = vmatprep.subr.mxu0 0.0
          %507 = vmatpush1.msra.mxu0 0.0
          %508 = vmatprep.subr.mxu0 0.0
          %509 = vmatpush1.msra.mxu0 0.0
          %510 = vmatprep.subr.mxu0 0.0
          %511 = vmatpush1.msra.mxu0 0.0
          %512 = vmatprep.subr.mxu0 0.0
          %513 = vmatpush1.msra.mxu0 0.0
          %514 = vmatprep.subr.mxu0 0.0
          %515 = vmatpush1.msra.mxu0 0.0
          %516 = vmatprep.subr.mxu0 0.0
          %517 = vmatpush1.msra.mxu0 0.0
          %518 = vmatprep.subr.mxu0 0.0
          %519 = vmatpush1.msra.mxu0 0.0
          %520 = vmatprep.subr.mxu0 0.0
          %521 = vmatpush1.msra.mxu0 0.0
          %522 = vmatprep.subr.mxu0 0.0
          %523 = vmatpush1.msra.mxu0 0.0
          %524 = vmatprep.subr.mxu0 0.0
          %525 = vmatpush1.msra.mxu0 0.0
          %526 = vmatprep.subr.mxu0 0.0
          %527 = vmatpush1.msra.mxu0 0.0
          %528 = vmatprep.subr.mxu0 0.0
          %529 = vmatpush1.msra.mxu0 0.0
          %530 = vmatprep.subr.mxu0 0.0
          %531 = vmatpush1.msra.mxu0 0.0
          %532 = vmatprep.subr.mxu0 0.0
          %533 = vmatpush1.msra.mxu0 0.0
          %534 = vmatprep.subr.mxu0 0.0
          %535 = vmatpush1.msra.mxu0 0.0
          %536 = vmatprep.subr.mxu0 0.0
          %537 = vmatpush1.msra.mxu0 0.0
          %538 = vmatprep.subr.mxu0 0.0
          %539 = vmatpush1.msra.mxu0 0.0
          %540 = vmatprep.subr.mxu0 0.0
          %541 = vmatpush1.msra.mxu0 0.0
          %542 = vmatprep.subr.mxu0 0.0
          %543 = vmatpush1.msra.mxu0 0.0
          %544 = vmatprep.subr.mxu0 0.0
          %545 = vmatpush1.msra.mxu0 0.0
          %546 = vmatprep.subr.mxu0 0.0
          %547 = vmatpush1.msra.mxu0 0.0
          %548 = vmatprep.subr.mxu0 0.0
          %549 = vmatpush1.msra.mxu0 0.0
          %550 = vmatprep.subr.mxu0 0.0
          %551 = vmatpush1.msra.mxu0 0.0
          %552 = vmatprep.subr.mxu0 0.0
          %553 = vmatpush1.msra.mxu0 0.0
          %554 = vmatprep.subr.mxu0 0.0
          %555 = vmatpush1.msra.mxu0 0.0
          %556 = vmatprep.mubr.f32.mxu0 0.0
          %557 = vmatmul.mubr.f32.gmra.mrb[0].mxu0 %v487
          %v558 = vpop.f32.mrb[0].mxu0
          %v559 = vadd.f32 %v479, %v558
          %v560 = vpop.f32.mrb[0].mxu0
          %v561 = vadd.f32 %v479, %v560
          %562 = vmatprep.mubr.f32.mxu0 0.0
          %563 = vmatmul.mubr.f32.gmra.mrb[0].mxu0 %v490
          %v564 = vpop.f32.mrb[0].mxu0
          %v565 = vadd.f32 %v483, %v564
          %v566 = vpop.f32.mrb[0].mxu0
          %v567 = vadd.f32 %v483, %v566
          %568 = vdwg.mxu0
          %v569 = vmax.f32 %v559, 0.0
          %v570 = vmax.f32 %v561, 0.0
          %v571 = vmax.f32 %v565, 0.0
          %v572 = vmax.f32 %v567, 0.0
          %v573 = vadd.f32 %v569, %v570
          %574 = vadd.xlane.f32.xlu0 %v573
          %v575 = vpop.xlane.xlu0 %574
          %v576 = vadd.f32 %v571, %v572
          %577 = vadd.xlane.f32.xlu0 %v576
          %v578 = vpop.xlane.xlu0 %577
          %v579 = vrcp.pop 256.0
          %v580 = vmul.f32 %v575, %v579
          %v581 = vmul.f32 %v578, %v579
          %v582 = vld [vmem:[%s4] sm:$0xff]
          %v583 = vld [vmem:[%s4 + $0x8] sm:$0x1]
          %v584 = vld [vmem:[%s6] sm:$0xff]
          %v585 = vld [vmem:[%s6 + $0x8] sm:$0x1]
          %587 = vset.pattern.permute.xlu0 0
          %588 = vperm.xlu0 %587, %v584
          %v589 = vpop.permute.xlu0 %588
          %592 = vset.pattern.permute.xlu0 0
          %593 = vperm.xlu0 %592, %v585
          %v594 = vpop.permute.xlu0 %593
          %v597 = vsel %vm485, %v582, 0
          %v600 = vsel %vm485, %v583, 0
          %602 = vmatprep.subr.mxu0 0.0
          %603 = vmatpush1.msra.mxu0 %v580
          %604 = vmatprep.subr.mxu0 0.0
          %605 = vmatpush1.msra.mxu0 %v581
          %606 = vmatprep.subr.mxu0 0.0
          %607 = vmatpush1.msra.mxu0 0.0
          %608 = vmatprep.subr.mxu0 0.0
          %609 = vmatpush1.msra.mxu0 0.0
          %610 = vmatprep.subr.mxu0 0.0
          %611 = vmatpush1.msra.mxu0 0.0
          %612 = vmatprep.subr.mxu0 0.0
          %613 = vmatpush1.msra.mxu0 0.0
          %614 = vmatprep.subr.mxu0 0.0
          %615 = vmatpush1.msra.mxu0 0.0
          %616 = vmatprep.subr.mxu0 0.0
          %617 = vmatpush1.msra.mxu0 0.0
          %618 = vmatprep.subr.mxu0 0.0
          %619 = vmatpush1.msra.mxu0 0.0
          %620 = vmatprep.subr.mxu0 0.0
          %621 = vmatpush1.msra.mxu0 0.0
          %622 = vmatprep.subr.mxu0 0.0
          %623 = vmatpush1.msra.mxu0 0.0
          %624 = vmatprep.subr.mxu0 0.0
          %625 = vmatpush1.msra.mxu0 0.0
          %626 = vmatprep.subr.mxu0 0.0
          %627 = vmatpush1.msra.mxu0 0.0
          %628 = vmatprep.subr.mxu0 0.0
          %629 = vmatpush1.msra.mxu0 0.0
          %630 = vmatprep.subr.mxu0 0.0
          %631 = vmatpush1.msra.mxu0 0.0
          %632 = vmatprep.subr.mxu0 0.0
          %633 = vmatpush1.msra.mxu0 0.0
          %634 = vmatprep.subr.mxu0 0.0
          %635 = vmatpush1.msra.mxu0 0.0
          %636 = vmatprep.subr.mxu0 0.0
          %637 = vmatpush1.msra.mxu0 0.0
          %638 = vmatprep.subr.mxu0 0.0
          %639 = vmatpush1.msra.mxu0 0.0
          %640 = vmatprep.subr.mxu0 0.0
          %641 = vmatpush1.msra.mxu0 0.0
          %642 = vmatprep.subr.mxu0 0.0
          %643 = vmatpush1.msra.mxu0 0.0
          %644 = vmatprep.subr.mxu0 0.0
          %645 = vmatpush1.msra.mxu0 0.0
          %646 = vmatprep.subr.mxu0 0.0
          %647 = vmatpush1.msra.mxu0 0.0
          %648 = vmatprep.subr.mxu0 0.0
          %649 = vmatpush1.msra.mxu0 0.0
          %650 = vmatprep.subr.mxu0 0.0
          %651 = vmatpush1.msra.mxu0 0.0
          %652 = vmatprep.subr.mxu0 0.0
          %653 = vmatpush1.msra.mxu0 0.0
          %654 = vmatprep.subr.mxu0 0.0
          %655 = vmatpush1.msra.mxu0 0.0
          %656 = vmatprep.subr.mxu0 0.0
          %657 = vmatpush1.msra.mxu0 0.0
          %658 = vmatprep.subr.mxu0 0.0
          %659 = vmatpush1.msra.mxu0 0.0
          %660 = vmatprep.subr.mxu0 0.0
          %661 = vmatpush1.msra.mxu0 0.0
          %662 = vmatprep.subr.mxu0 0.0
          %663 = vmatpush1.msra.mxu0 0.0
          %664 = vmatprep.subr.mxu0 0.0
          %665 = vmatpush1.msra.mxu0 0.0
          %666 = vmatprep.mubr.f32.mxu0 0.0
          %667 = vmatmul.mubr.f32.gmra.mrb[0].mxu0 %v597
          %v668 = vpop.f32.mrb[0].mxu0
          %v669 = vadd.f32 %v589, %v668
          %v670 = vpop.f32.mrb[0].mxu0
          %671 = vmatprep.mubr.f32.mxu0 0.0
          %672 = vmatmul.mubr.f32.gmra.mrb[0].mxu0 %v600
          %v673 = vpop.f32.mrb[0].mxu0
          %v674 = vadd.f32 %v594, %v673
          %v675 = vpop.f32.mrb[0].mxu0
          %676 = vdwg.mxu0
          %vm677 = vcmask 1040384
          %v678 = vsel %vm677, %v674, -inf
          %v679 = vmax.f32 %v669, %v678
          %v680 = vrot.slane %v679, 4
          %v681 = vmax.f32 %v679, %v680
          %v682 = vrot.slane %v681, 2
          %v683 = vmax.f32 %v681, %v682
          %v684 = vrot.slane %v683, 1
          %v685 = vmax.f32 %v683, %v684
          %v686 = vsub.f32 %v669, %v685
          %v687 = vsub.f32 %v674, %v685
          %v688 = vmul.f32 %v686, 1.442695
          %v689 = vpow.pop %v688
          %v690 = vmul.f32 %v687, 1.442695
          %v691 = vpow.pop %v690
          %v692 = vsel %vm677, %v691, 0.0
          %v693 = vadd.f32 %v689, %v692
          %v694 = vrot.slane %v693, 4
          %v695 = vadd.f32 %v693, %v694
          %v696 = vrot.slane %v695, 2
          %v697 = vadd.f32 %v695, %v696
          %v698 = vrot.slane %v697, 1
          %v699 = vadd.f32 %v697, %v698
          %v700 = vrcp.pop %v699
          %v701 = vmul.f32 %v689, %v700
          %v702 = vmul.f32 %v691, %v700
          %703 = vst [vmem:[#allocation2] sm:$0xff] %v701
          %704 = vst [vmem:[#allocation2 + $0x8] sm:$0x1] %v702
        $region60: #{tpu_custom_call.1} parent=51 // pred_fallthru
          _
        %v705 = vld [vmem:[#allocation2] sm:$0xff]
        %v706 = vld [vmem:[#allocation2 + $0x8] sm:$0x1]
        %v707 = vld [vmem:[%s318] sm:$0xff]
        %v708 = vlaneseq
        %v709 = vshrl.u32 %v708, 7
        %v710 = vsub.s32 0, %v709
        %v711 = vrot.slane %v705, %v710
        %v712 = vmul.f32 %v707, %v711
        %s713 = scalar_lea.vmem %s318, 8 [#allocation3]
        %v714 = vld [vmem:[%s713] sm:$0xff]
        %v715 = vlaneseq
        %v716 = vshrl.u32 %v715, 7
        %v717 = vsub.s32 1, %v716
        %v718 = vrot.slane %v705, %v717
        %v719 = vmul.f32 %v714, %v718
        %v720 = vadd.f32 %v712, %v719
        %s721 = scalar_lea.vmem %s318, 16 [#allocation3]
        %v722 = vld [vmem:[%s721] sm:$0xff]
        %v723 = vlaneseq
        %v724 = vshrl.u32 %v723, 7
        %v725 = vsub.s32 2, %v724
        %v726 = vrot.slane %v705, %v725
        %v727 = vmul.f32 %v722, %v726
        %v728 = vadd.f32 %v720, %v727
        %s729 = scalar_lea.vmem %s318, 24 [#allocation3]
        %v730 = vld [vmem:[%s729] sm:$0xff]
        %v731 = vlaneseq
        %v732 = vshrl.u32 %v731, 7
        %v733 = vsub.s32 3, %v732
        %v734 = vrot.slane %v705, %v733
        %v735 = vmul.f32 %v730, %v734
        %v736 = vadd.f32 %v728, %v735
        %s737 = scalar_lea.vmem %s318, 32 [#allocation3]
        %v738 = vld [vmem:[%s737] sm:$0xff]
        %v739 = vlaneseq
        %v740 = vshrl.u32 %v739, 7
        %v741 = vsub.s32 4, %v740
        %v742 = vrot.slane %v705, %v741
        %v743 = vmul.f32 %v738, %v742
        %v744 = vadd.f32 %v736, %v743
        %s745 = scalar_lea.vmem %s318, 40 [#allocation3]
        %v746 = vld [vmem:[%s745] sm:$0xff]
        %v747 = vlaneseq
        %v748 = vshrl.u32 %v747, 7
        %v749 = vsub.s32 5, %v748
        %v750 = vrot.slane %v705, %v749
        %v751 = vmul.f32 %v746, %v750
        %v752 = vadd.f32 %v744, %v751
        %s753 = scalar_lea.vmem %s318, 48 [#allocation3]
        %v754 = vld [vmem:[%s753] sm:$0xff]
        %v755 = vlaneseq
        %v756 = vshrl.u32 %v755, 7
        %v757 = vsub.s32 6, %v756
        %v758 = vrot.slane %v705, %v757
        %v759 = vmul.f32 %v754, %v758
        %v760 = vadd.f32 %v752, %v759
        %s761 = scalar_lea.vmem %s318, 56 [#allocation3]
        %v762 = vld [vmem:[%s761] sm:$0xff]
        %v763 = vlaneseq
        %v764 = vshrl.u32 %v763, 7
        %v765 = vsub.s32 7, %v764
        %v766 = vrot.slane %v705, %v765
        %v767 = vmul.f32 %v762, %v766
        %v768 = vadd.f32 %v760, %v767
        %s769 = scalar_lea.vmem %s318, 64 [#allocation3]
        %v770 = vld [vmem:[%s769] sm:$0xff]
        %v771 = vlaneseq
        %v772 = vshrl.u32 %v771, 7
        %v773 = vsub.s32 0, %v772
        %v774 = vrot.slane %v706, %v773
        %v775 = vmul.f32 %v770, %v774
        %v776 = vadd.f32 %v768, %v775
        %v777 = vld [vmem:[%s7] sm:$0x1]
        %vm778 = vcmp.ge.f32.partialorder %v776, 0.0
        %v780 = vlaneseq
        %v781 = vshrl.u32 %v780, 7
        %v782 = vsub.s32 0, %v781
        %v783 = vrot.slane %v777, %v782
        %v785 = vmul.f32 %v783, %v776
        %v786 = vsel %vm778, %v776, %v785
        %787 = vst [vmem:[%s355] sm:$0xff] %v786
        %s788 = sand.u32 %s227, 1
        %s789 = scalar_lea.sflag [#allocation5], %s788
        %s790 = sand.u32 %s227, 1
        %s791 = smul.addr %s790, 8
        %s792 = scalar_lea.vmem [#allocation6], %s791
        // Predicated region
        $region61: #{tpu_custom_call.1} parent=51 // pred_check
          %p793 = pneg %p237
        $region62: #{tpu_custom_call.1} parent=51 // pred_check_branch
          %795 = sbr.rel (%p793) target = $region64
        $region63: #{tpu_custom_call.1} parent=51 // pred_region
          %s797 = ssub.s32 128, 128
          %798 = vsyncadd %s789, %s797
          %s799 = sadd.s32 %s30, %s29
          %s800 = smul.addr %s799, 128
          %s801 = scalar_lea.hbm %s8, %s800
          %s803 = sshll.u32 %s792, 4
          %s804 = int_to_ptr.vmem [resolvable:$true] %s803
          %806 = dma.vmem_to_hbm [thread:$0]  %s804, 128, %s801, %s789
        $region64: #{tpu_custom_call.1} parent=51 // pred_fallthru
          _
      $region52: #{tpu_custom_call.1} parent=5 // pred_fallthru
        _
      %p807 = scmp.le.s32.totalorder 2, %s20
      // Predicated region
      $region65: #{tpu_custom_call.1} parent=5 // pred_check
        %p808 = pneg %p807
      $region66: #{tpu_custom_call.1} parent=5 // pred_check_branch
        %810 = sbr.rel (%p808) target = $region68
      $region67: #{tpu_custom_call.1} parent=5 // pred_region
        %s811 = ssub.s32 %s20, 2
        // Predicated region
        $region69: #{tpu_custom_call.1} parent=67 // pred_check
          %p812 = pneg %p243
        $region70: #{tpu_custom_call.1} parent=67 // pred_check_branch
          %814 = sbr.rel (%p812) target = $region72
        $region71: #{tpu_custom_call.1} parent=67 // pred_region
          %s815 = sand.u32 %s228, 1
          %s816 = scalar_lea.sflag [#allocation5], %s815
          %s817 = sand.u32 %s228, 1
          %s818 = smul.addr %s817, 8
          %s819 = scalar_lea.vmem [#allocation6], %s818
          %820 = dma.done %s816, 128
        $region72: #{tpu_custom_call.1} parent=67 // pred_fallthru
          _
      $region68: #{tpu_custom_call.1} parent=5 // pred_fallthru
        _
    $region6: #{tpu_custom_call.1} parent=1 // loop_footer
      %s24 = sadd.s32 1, %s20
    $region7: #{tpu_custom_call.1} parent=1 // loop_footer_branch
      %19 = sbr.rel target = $region3
    $region8: #{tpu_custom_call.1} parent=1 // loop_exit
      _
    %821 = vsyncpa [#allocation4], 1
    %s822 = scalar_lea.sflag [#allocation4], 1
    %823 = vsyncpa %s822, 1
    %824 = vsyncpa [#allocation5], 1
    %s825 = scalar_lea.sflag [#allocation5], 1
    %826 = vsyncpa %s825, 1

</llo_original>
